<compile_context>
chip_gen: v6e
topology: v6e:2x2x1
jax: 0.10.0
libtpu: 0.0.40
codegen_flags: <defaults>
</compile_context>

<pallas_src>
import functools

import jax
import jax.numpy as jnp
import numpy as np
from jax.experimental import pallas as pl
from jax.experimental.pallas import tpu as pltpu

_LANE = 128


def _round_up(x, m):
    return ((x + m - 1) // m) * m


def _num_parallel_batch_blocks(n):
    """2 'parallel' grid blocks on multi-TensorCore chips (v4/v5p/v7x), else 1."""
    if n < 2:
        return 1
    try:
        kind = jax.devices()[0].device_kind.lower()
    except Exception:
        kind = ""
    multi_tc = any(t in kind for t in ("v4", "v5p", "v5 p", "7"))
    return 2 if multi_tc else 1


def _maybe_vmem_limit(footprint_bytes):
    """Only raise the scoped VMEM limit when the default (16/32 MiB) is too tight."""
    if footprint_bytes <= (12 << 20):
        return None
    return int(min(footprint_bytes + (4 << 20), 112 << 20))


# ----------------------------------------------------------------------------- kernels


def _se_fused_kernel(x_ref, w1_ref, b1_ref, w2_ref, b2_ref, out_ref, *, inv_hw):
    """One (BN, C, HWpad) block per grid step: pool + FC1/ReLU + FC2/sigmoid + scale.

    x_ref   : (BN, C, HWpad)  spatial axis lane-dense (multiple of 128), zero-padded
    w1_ref  : (C, hidden)     first FC weight, channel on sublanes
    b1_ref  : (1, hidden)
    w2_ref  : (C, hidden)     second FC weight, channel on sublanes
    b2_ref  : (C, 1)
    out_ref : (BN, C, HWpad)
    """
    # ---- squeeze: mean over the lane axis.  Padded lanes are zero -> sum over the
    # padded width times 1/HW(true) is exact. -------------------------------------
    pooled = jnp.sum(x_ref[...].astype(jnp.float32), axis=2, keepdims=True) * inv_hw  # (BN,C,1)

    # ---- excitation FC1 + ReLU: contract over C (sublane reduce) -> (BN, 1, hidden)
    h = jnp.sum(w1_ref[...][None, :, :] * pooled, axis=1, keepdims=True) + b1_ref[...][None, :, :]
    h = jnp.maximum(h, 0.0)

    # ---- excitation FC2 + sigmoid: contract over hidden (lane reduce) -> (BN, C, 1)
    z = jnp.sum(w2_ref[...][None, :, :] * h, axis=2, keepdims=True) + b2_ref[...][None, :, :]
    s = jax.nn.sigmoid(z)  # exp rides the EUP; no hand-rolled f32 VALU divide

    # ---- scale: re-index x from VMEM (3 vld/cycle is nowhere near the bottleneck)
    # instead of keeping the big tile live across the gate math (avoids vreg spills
    # when the block grows to production sizes). -----------------------------------
    out_ref[...] = (x_ref[...].astype(jnp.float32) * s).astype(out_ref.dtype)


def _se_gate_kernel(x_ref, w1_ref, b1_ref, w2_ref, b2_ref, gate_ref, acc_ref, *, inv_hw):
    """Tiled-HW pooling (partial sums) + FC/gate finalize on the last tile."""
    t = pl.program_id(1)

    @pl.when(t == 0)
    def _():
        acc_ref[...] = jnp.zeros_like(acc_ref)

    acc_ref[...] += jnp.sum(x_ref[...].astype(jnp.float32), axis=2, keepdims=True)

    @pl.when(t == pl.num_programs(1) - 1)
    def _():
        pooled = acc_ref[...] * inv_hw                                              # (BN,C,1)
        h = jnp.sum(w1_ref[...][None, :, :] * pooled, axis=1, keepdims=True)
        h = jnp.maximum(h + b1_ref[...][None, :, :], 0.0)
        z = jnp.sum(w2_ref[...][None, :, :] * h, axis=2, keepdims=True) + b2_ref[...][None, :, :]
        gate_ref[...] = jax.nn.sigmoid(z)[:, :, 0]                                  # (BN, C)


def _se_scale_kernel(x_ref, gate_ref, out_ref):
    """Lane-dense tiled scale: out = x * gate (gate broadcast across the spatial lanes)."""
    out_ref[...] = (
        x_ref[...].astype(jnp.float32) * gate_ref[...][:, :, None]
    ).astype(out_ref.dtype)


# ----------------------------------------------------------------------------- wrapper


def se_block_forward(x_nchw, params, *, io_dtype=None, vmem_budget_bytes=24 << 20):
    """Pallas SEBlock forward.  x_nchw: (N, C, H, W), PyTorch layout.

    io_dtype: optional dtype for the large HBM-resident x / out arrays (e.g. bf16 to
    halve memory traffic).  Arithmetic is always f32 in-kernel.  Default: x.dtype.
    """
    N, C, H, W = x_nchw.shape
    HW = H * W
    hidden = params["w1"].shape[0]
    io_dtype = x_nchw.dtype if io_dtype is None else io_dtype
    itemsize = jnp.dtype(io_dtype).itemsize

    # Contiguous reshape only (no layout transpose); pad HW to a multiple of 128 so the
    # dominant stores are unmasked, lane-dense `vst`.
    hw_pad = max(_LANE, _round_up(HW, _LANE))
    xf = x_nchw.reshape(N, C, HW)
    if hw_pad != HW:
        xf = jnp.pad(xf, ((0, 0), (0, 0), (0, hw_pad - HW)))
    xf = xf.astype(io_dtype)

    # Tiny weight prep (constant-folded by XLA): channel axis on sublanes, f32 compute.
    w1c = jnp.transpose(params["w1"], (1, 0)).astype(jnp.float32)   # (C, hidden)
    b1r = params["b1"].reshape(1, hidden).astype(jnp.float32)       # (1, hidden)
    w2c = params["w2"].astype(jnp.float32)                          # (C, hidden)
    b2c = params["b2"].reshape(C, 1).astype(jnp.float32)            # (C, 1)

    # Right-size the grid to the core count: 1 block on single-TC chips, 2 on multi-TC.
    n_blocks = _num_parallel_batch_blocks(N)
    if N % n_blocks:
        n_blocks = 1
    bn = N // n_blocks

    # Weight specs are identical in both paths (constant block index).
    w_specs = [
        pl.BlockSpec((C, hidden), lambda *_: (0, 0)),   # W1^T
        pl.BlockSpec((1, hidden), lambda *_: (0, 0)),   # b1
        pl.BlockSpec((C, hidden), lambda *_: (0, 0)),   # W2
        pl.BlockSpec((C, 1), lambda *_: (0, 0)),        # b2
    ]

    # in-block + out-block, each double-buffered by the BlockSpec pipeline.
    fused_footprint = 4 * bn * C * hw_pad * itemsize

    if fused_footprint <= vmem_budget_bytes:
        # ---------------- fused single-pass kernel (toy / moderate shapes) ----------
        cost = pl.CostEstimate(
            flops=N * (3 * C * hw_pad + 4 * C * hidden),
            transcendentals=N * C,
            bytes_accessed=2 * N * C * hw_pad * itemsize + 4 * (2 * C * hidden + C + hidden),
        )
        out = pl.pallas_call(
            functools.partial(_se_fused_kernel, inv_hw=1.0 / HW),
            out_shape=jax.ShapeDtypeStruct((N, C, hw_pad), io_dtype),
            grid_spec=pltpu.PrefetchScalarGridSpec(
                num_scalar_prefetch=0,
                grid=(n_blocks,),
                in_specs=[pl.BlockSpec((bn, C, hw_pad), lambda b: (b, 0, 0))] + w_specs,
                out_specs=pl.BlockSpec((bn, C, hw_pad), lambda b: (b, 0, 0)),
            ),
            compiler_params=pltpu.CompilerParams(
                dimension_semantics=("parallel",),
                vmem_limit_bytes=_maybe_vmem_limit(fused_footprint),
            ),
            cost_estimate=cost,
        )(xf, w1c, b1r, w2c, b2c)
        out_hw = hw_pad
    else:
        # ---------------- production shapes: HW-tiled two-kernel path ---------------
        # Grow the lane-dense HW tile as far as the VMEM budget allows (>=512 lanes keeps
        # ~85%+ of HBM roofline), then pad HW to a multiple of the tile.
        hw_tile = _LANE
        while hw_tile * 2 <= hw_pad and 4 * bn * C * (hw_tile * 2) * itemsize <= vmem_budget_bytes:
            hw_tile *= 2
        hw_tiled = _round_up(hw_pad, hw_tile)
        if hw_tiled != hw_pad:
            xf = jnp.pad(xf, ((0, 0), (0, 0), (0, hw_tiled - hw_pad)))
        n_hw = hw_tiled // hw_tile
        tile_footprint = 4 * bn * C * hw_tile * itemsize
        vmem_limit = _maybe_vmem_limit(tile_footprint)

        # Pass 1: pool (partial sums over HW tiles, reduction axis last) + FC gate.
        gate = pl.pallas_call(
            functools.partial(_se_gate_kernel, inv_hw=1.0 / HW),
            out_shape=jax.ShapeDtypeStruct((N, C), jnp.float32),
            grid_spec=pltpu.PrefetchScalarGridSpec(
                num_scalar_prefetch=0,
                grid=(n_blocks, n_hw),
                in_specs=[pl.BlockSpec((bn, C, hw_tile), lambda b, t: (b, 0, t))] + w_specs,
                out_specs=pl.BlockSpec((bn, C), lambda b, t: (b, 0)),
                scratch_shapes=[pltpu.VMEM((bn, C, 1), jnp.float32)],
            ),
            compiler_params=pltpu.CompilerParams(
                dimension_semantics=("parallel", "arbitrary"),
                vmem_limit_bytes=vmem_limit,
            ),
        )(xf, w1c, b1r, w2c, b2c)

        # Pass 2: lane-dense tiled broadcast scale.
        out = pl.pallas_call(
            _se_scale_kernel,
            out_shape=jax.ShapeDtypeStruct((N, C, hw_tiled), io_dtype),
            grid_spec=pltpu.PrefetchScalarGridSpec(
                num_scalar_prefetch=0,
                grid=(n_blocks, n_hw),
                in_specs=[
                    pl.BlockSpec((bn, C, hw_tile), lambda b, t: (b, 0, t)),
                    pl.BlockSpec((bn, C), lambda b, t: (b, 0)),
                ],
                out_specs=pl.BlockSpec((bn, C, hw_tile), lambda b, t: (b, 0, t)),
            ),
            compiler_params=pltpu.CompilerParams(
                dimension_semantics=("parallel", "parallel"),
                vmem_limit_bytes=vmem_limit,
            ),
        )(xf, gate)
        out_hw = hw_tiled

    if out_hw != HW:
        out = out[:, :, :HW]
    return out.reshape(N, C, H, W)


# --------------------------------------------------------------------------- reference


def reference_forward(x, params):
    """Pure-JAX (XLA) reference mirroring the PyTorch SEBlock.forward."""
    pooled = jnp.mean(x, axis=(2, 3))                                  # (N, C)
    h = jax.nn.relu(pooled @ params["w1"].T + params["b1"])            # (N, hidden)
    s = jax.nn.sigmoid(h @ params["w2"].T + params["b2"])              # (N, C)
    return x * s[:, :, None, None]


def init_params(key, inplanes, r=16):
    """PyTorch nn.Linear-style parameters (uniform +-1/sqrt(fan_in))."""
    hidden = inplanes // r
    k1, k2, k3, k4 = jax.random.split(key, 4)
    bound1 = 1.0 / np.sqrt(inplanes)
    bound2 = 1.0 / np.sqrt(hidden)
    return {
        "w1": jax.random.uniform(k1, (hidden, inplanes), jnp.float32, -bound1, bound1),
        "b1": jax.random.uniform(k2, (hidden,), jnp.float32, -bound1, bound1),
        "w2": jax.random.uniform(k3, (inplanes, hidden), jnp.float32, -bound2, bound2),
        "b2": jax.random.uniform(k4, (inplanes,), jnp.float32, -bound2, bound2),
    }


if __name__ == "__main__":
    # Small shapes consistent with the module: inplanes=64, r=16 -> hidden=4.
    N, C, H, W, r = 2, 64, 16, 16, 16

    key = jax.random.PRNGKey(0)
    kx, kp = jax.random.split(key)
    x = jax.random.normal(kx, (N, C, H, W), jnp.float32)   # NCHW, like PyTorch
    params = init_params(kp, C, r=r)

    out = jax.block_until_ready(se_block_forward(x, params))
    ref = jax.block_until_ready(reference_forward(x, params))
    np.testing.assert_allclose(np.asarray(out), np.asarray(ref), rtol=1e-4, atol=1e-5)

    print("KERNEL_OK")
</pallas_src>

<mosaic_0001>
module attributes {stable_mosaic.version = 11 : i64} {
  func.func @_se_fused_kernel(%arg0: i32, %arg1: memref<2x64x256xf32, #tpu.memory_space<vmem>>, %arg2: memref<64x4xf32, #tpu.memory_space<vmem>>, %arg3: memref<1x4xf32, #tpu.memory_space<vmem>>, %arg4: memref<64x4xf32, #tpu.memory_space<vmem>>, %arg5: memref<64x1xf32, #tpu.memory_space<vmem>>, %arg6: memref<2x64x256xf32, #tpu.memory_space<vmem>>) attributes {dimension_semantics = [#tpu.dimension_semantics<parallel>], iteration_bounds = array<i64: 1>, scalar_prefetch = 0 : i64, scratch_operands = 0 : i64, tpu.core_type = #tpu.core_type<tc>, window_params = [{transform_indices = @transform_0, window_bounds = array<i64: 2, 64, 256>}, {pipeline_mode = #tpu.pipeline_mode<synchronous>, transform_indices = @transform_1, window_bounds = array<i64: 64, 4>}, {pipeline_mode = #tpu.pipeline_mode<synchronous>, transform_indices = @transform_2, window_bounds = array<i64: 1, 4>}, {pipeline_mode = #tpu.pipeline_mode<synchronous>, transform_indices = @transform_3, window_bounds = array<i64: 64, 4>}, {pipeline_mode = #tpu.pipeline_mode<synchronous>, transform_indices = @transform_4, window_bounds = array<i64: 64, 1>}, {transform_indices = @transform_5, window_bounds = array<i64: 2, 64, 256>}]} {
    %c0 = arith.constant 0 : index
    %c0_0 = arith.constant 0 : index
    %c0_1 = arith.constant 0 : index
    %0 = vector.load %arg1[%c0, %c0_0, %c0_1] : memref<2x64x256xf32, #tpu.memory_space<vmem>>, vector<2x64x256xf32>
    %cst = arith.constant dense<0.000000e+00> : vector<2x64xf32>
    %1 = vector.multi_reduction <add>, %0, %cst [2] : vector<2x64x256xf32> to vector<2x64xf32>
    %2 = vector.shape_cast %1 : vector<2x64xf32> to vector<2x64x1xf32>
    %cst_2 = arith.constant 3.906250e-03 : f32
    %3 = vector.broadcast %cst_2 : f32 to vector<2x64x1xf32>
    %4 = arith.mulf %2, %3 : vector<2x64x1xf32>
    %c0_3 = arith.constant 0 : index
    %c0_4 = arith.constant 0 : index
    %5 = vector.load %arg2[%c0_3, %c0_4] : memref<64x4xf32, #tpu.memory_space<vmem>>, vector<64x4xf32>
    %6 = vector.shape_cast %5 : vector<64x4xf32> to vector<1x64x4xf32>
    %7 = vector.broadcast %6 : vector<1x64x4xf32> to vector<2x64x4xf32>
    %8 = vector.broadcast %4 : vector<2x64x1xf32> to vector<2x64x4xf32>
    %9 = arith.mulf %7, %8 : vector<2x64x4xf32>
    %cst_5 = arith.constant dense<0.000000e+00> : vector<2x4xf32>
    %10 = vector.multi_reduction <add>, %9, %cst_5 [1] : vector<2x64x4xf32> to vector<2x4xf32>
    %11 = vector.shape_cast %10 : vector<2x4xf32> to vector<2x1x4xf32>
    %c0_6 = arith.constant 0 : index
    %c0_7 = arith.constant 0 : index
    %12 = vector.load %arg3[%c0_6, %c0_7] : memref<1x4xf32, #tpu.memory_space<vmem>>, vector<1x4xf32>
    %13 = vector.shape_cast %12 : vector<1x4xf32> to vector<1x1x4xf32>
    %14 = vector.broadcast %13 : vector<1x1x4xf32> to vector<2x1x4xf32>
    %15 = arith.addf %11, %14 : vector<2x1x4xf32>
    %cst_8 = arith.constant 0.000000e+00 : f32
    %16 = vector.broadcast %cst_8 : f32 to vector<2x1x4xf32>
    %17 = arith.maximumf %15, %16 : vector<2x1x4xf32>
    %c0_9 = arith.constant 0 : index
    %c0_10 = arith.constant 0 : index
    %18 = vector.load %arg4[%c0_9, %c0_10] : memref<64x4xf32, #tpu.memory_space<vmem>>, vector<64x4xf32>
    %19 = vector.shape_cast %18 : vector<64x4xf32> to vector<1x64x4xf32>
    %20 = vector.broadcast %19 : vector<1x64x4xf32> to vector<2x64x4xf32>
    %21 = vector.broadcast %17 : vector<2x1x4xf32> to vector<2x64x4xf32>
    %22 = arith.mulf %20, %21 : vector<2x64x4xf32>
    %cst_11 = arith.constant dense<0.000000e+00> : vector<2x64xf32>
    %23 = vector.multi_reduction <add>, %22, %cst_11 [2] : vector<2x64x4xf32> to vector<2x64xf32>
    %24 = vector.shape_cast %23 : vector<2x64xf32> to vector<2x64x1xf32>
    %c0_12 = arith.constant 0 : index
    %c0_13 = arith.constant 0 : index
    %25 = vector.load %arg5[%c0_12, %c0_13] : memref<64x1xf32, #tpu.memory_space<vmem>>, vector<64x1xf32>
    %26 = vector.shape_cast %25 : vector<64x1xf32> to vector<1x64x1xf32>
    %27 = vector.broadcast %26 : vector<1x64x1xf32> to vector<2x64x1xf32>
    %28 = arith.addf %24, %27 : vector<2x64x1xf32>
    %29 = arith.negf %28 : vector<2x64x1xf32>
    %30 = math.exp %29 : vector<2x64x1xf32>
    %cst_14 = arith.constant 1.000000e+00 : f32
    %31 = vector.broadcast %cst_14 : f32 to vector<2x64x1xf32>
    %32 = arith.addf %31, %30 : vector<2x64x1xf32>
    %33 = arith.divf %31, %32 : vector<2x64x1xf32>
    %c0_15 = arith.constant 0 : index
    %c0_16 = arith.constant 0 : index
    %c0_17 = arith.constant 0 : index
    %34 = vector.load %arg1[%c0_15, %c0_16, %c0_17] : memref<2x64x256xf32, #tpu.memory_space<vmem>>, vector<2x64x256xf32>
    %35 = vector.broadcast %33 : vector<2x64x1xf32> to vector<2x64x256xf32>
    %36 = arith.mulf %34, %35 : vector<2x64x256xf32>
    %c0_18 = arith.constant 0 : index
    %c0_19 = arith.constant 0 : index
    %c0_20 = arith.constant 0 : index
    %37 = vector.load %arg6[%c0_18, %c0_19, %c0_20] : memref<2x64x256xf32, #tpu.memory_space<vmem>>, vector<2x64x256xf32>
    tpu.vector_store %arg6[%c0_18, %c0_19, %c0_20], %36 {strides = array<i32>} : memref<2x64x256xf32, #tpu.memory_space<vmem>>, vector<2x64x256xf32>,
    return
  }
  func.func @transform_0(%arg0: i32) -> (i32, i32, i32) {
    %c0_i32 = arith.constant 0 : i32
    %c0_i32_0 = arith.constant 0 : i32
    %c0_i32_1 = arith.constant 0 : i32
    return %arg0, %c0_i32, %c0_i32_0 : i32, i32, i32
  }
  func.func @transform_1(%arg0: i32) -> (i32, i32) {
    %c0_i32 = arith.constant 0 : i32
    %c0_i32_0 = arith.constant 0 : i32
    %c0_i32_1 = arith.constant 0 : i32
    return %c0_i32, %c0_i32_0 : i32, i32
  }
  func.func @transform_2(%arg0: i32) -> (i32, i32) {
    %c0_i32 = arith.constant 0 : i32
    %c0_i32_0 = arith.constant 0 : i32
    %c0_i32_1 = arith.constant 0 : i32
    return %c0_i32, %c0_i32_0 : i32, i32
  }
  func.func @transform_3(%arg0: i32) -> (i32, i32) {
    %c0_i32 = arith.constant 0 : i32
    %c0_i32_0 = arith.constant 0 : i32
    %c0_i32_1 = arith.constant 0 : i32
    return %c0_i32, %c0_i32_0 : i32, i32
  }
  func.func @transform_4(%arg0: i32) -> (i32, i32) {
    %c0_i32 = arith.constant 0 : i32
    %c0_i32_0 = arith.constant 0 : i32
    %c0_i32_1 = arith.constant 0 : i32
    return %c0_i32, %c0_i32_0 : i32, i32
  }
  func.func @transform_5(%arg0: i32) -> (i32, i32, i32) {
    %c0_i32 = arith.constant 0 : i32
    %c0_i32_0 = arith.constant 0 : i32
    %c0_i32_1 = arith.constant 0 : i32
    return %arg0, %c0_i32, %c0_i32_0 : i32, i32, i32
  }
}

</mosaic_0001>

<llo_original>
// kernel: tpu_custom_call.1
$region0: #{tpu_custom_call.1}
  #allocation0 [shape = 'u32[]', space=smem, size = 0x4, offset = 0x4, fixed_abs, tag = 'smem constant byte address 0x4 - core index']
  #allocation1 [shape = 'u32[144,128]{1,0:T(1,128)}', space=vmem, size = 0x12000, scoped, tag = 'internal scratch']
  %s0 = inlined_call_operand.hbm [shape: f32[2,64,256], index: 0, kind: input, shape index: {}]
  %s1 = inlined_call_operand.vmem [shape: f32[64,4], index: 1, kind: input, shape index: {}]
  %s2 = inlined_call_operand.vmem [shape: f32[1,4], index: 2, kind: input, shape index: {}]
  %s3 = inlined_call_operand.vmem [shape: f32[64,4], index: 3, kind: input, shape index: {}]
  %s4 = inlined_call_operand.vmem [shape: f32[64,1], index: 4, kind: input, shape index: {}]
  %s5 = inlined_call_operand.hbm [shape: f32[2,64,256], index: 5, kind: output, shape index: {}]
  %s6 = sld [smem:[#allocation0]]
  $region34: #{tpu_custom_call.1} parent=0
    _
  %s8 = ssub.s32 1, %s6
  %s9 = scalar_select 0, %s8, %s6
  $region1: #{tpu_custom_call.1} parent=0
    #allocation2 [shape = 'u8[131072]{0}', space=vmem, size = 0x20000, scoped, tag = 'input window, operand 0, single buffered']
    #allocation3 [shape = 's32[1]{0}', space=sflag, size = 0x4, scoped, tag = 'scoped memory for tpu_custom_call.1']
    #allocation4 [shape = 's32[1]{0}', space=sflag, size = 0x4, scoped, tag = 'scoped memory for tpu_custom_call.1']
    #allocation5 [shape = 'u8[131072]{0}', space=vmem, size = 0x20000, scoped, tag = 'output window, operand 0, single buffered']
    %10 = vsyncpa [#allocation3], 0
    %11 = vsyncpa [#allocation4], 0
    // Predicated region
    $region2: #{tpu_custom_call.1} parent=1 // pred_check
      _
    $region3: #{tpu_custom_call.1} parent=1 // pred_check_branch
      %13 = sbr.rel (0) target = $region5
    $region4: #{tpu_custom_call.1} parent=1 // pred_region
      %s15 = ssub.s32 4096, 4096
      %16 = vsyncadd [#allocation3], %s15
      %s17 = sshll.u32 [#allocation2], 4
      %s18 = int_to_ptr.vmem [resolvable:$true] %s17
      %23 = dma.hbm_to_vmem [thread:$0]  %s0, 4096, %s18, [#allocation3], 256, 256, 16
    $region5: #{tpu_custom_call.1} parent=1 // pred_fallthru
      _
    // Predicated region
    $region6: #{tpu_custom_call.1} parent=1 // pred_check
      _
    $region7: #{tpu_custom_call.1} parent=1 // pred_check_branch
      %25 = sbr.rel (0) target = $region9
    $region8: #{tpu_custom_call.1} parent=1 // pred_region
      _
    $region9: #{tpu_custom_call.1} parent=1 // pred_fallthru
      _
    // Predicated region
    $region10: #{tpu_custom_call.1} parent=1 // pred_check
      _
    $region11: #{tpu_custom_call.1} parent=1 // pred_check_branch
      %27 = sbr.rel (0) target = $region13
    $region12: #{tpu_custom_call.1} parent=1 // pred_region
      _
    $region13: #{tpu_custom_call.1} parent=1 // pred_fallthru
      _
    // Predicated region
    $region14: #{tpu_custom_call.1} parent=1 // pred_check
      _
    $region15: #{tpu_custom_call.1} parent=1 // pred_check_branch
      %29 = sbr.rel (0) target = $region17
    $region16: #{tpu_custom_call.1} parent=1 // pred_region
      _
    $region17: #{tpu_custom_call.1} parent=1 // pred_fallthru
      _
    // Predicated region
    $region18: #{tpu_custom_call.1} parent=1 // pred_check
      _
    $region19: #{tpu_custom_call.1} parent=1 // pred_check_branch
      %31 = sbr.rel (0) target = $region21
    $region20: #{tpu_custom_call.1} parent=1 // pred_region
      _
    $region21: #{tpu_custom_call.1} parent=1 // pred_fallthru
      _
    // Predicated region
    $region22: #{tpu_custom_call.1} parent=1 // pred_check
      _
    $region23: #{tpu_custom_call.1} parent=1 // pred_check_branch
      %33 = sbr.rel (0) target = $region25
    $region24: #{tpu_custom_call.1} parent=1 // pred_region
      %34 = dma.done [#allocation3], 4096
    $region25: #{tpu_custom_call.1} parent=1 // pred_fallthru
      _
    %v35 = vld [vmem:[#allocation2] sm:$0xff]
    %v36 = vld [vmem:[#allocation2 + $0x8] sm:$0xff]
    %v37 = vld [vmem:[#allocation2 + $0x10] sm:$0xff]
    %v38 = vld [vmem:[#allocation2 + $0x18] sm:$0xff]
    %v39 = vld [vmem:[#allocation2 + $0x20] sm:$0xff]
    %v40 = vld [vmem:[#allocation2 + $0x28] sm:$0xff]
    %v41 = vld [vmem:[#allocation2 + $0x30] sm:$0xff]
    %v42 = vld [vmem:[#allocation2 + $0x38] sm:$0xff]
    %v43 = vld [vmem:[#allocation2 + $0x40] sm:$0xff]
    %v44 = vld [vmem:[#allocation2 + $0x48] sm:$0xff]
    %v45 = vld [vmem:[#allocation2 + $0x50] sm:$0xff]
    %v46 = vld [vmem:[#allocation2 + $0x58] sm:$0xff]
    %v47 = vld [vmem:[#allocation2 + $0x60] sm:$0xff]
    %v48 = vld [vmem:[#allocation2 + $0x68] sm:$0xff]
    %v49 = vld [vmem:[#allocation2 + $0x70] sm:$0xff]
    %v50 = vld [vmem:[#allocation2 + $0x78] sm:$0xff]
    %v51 = vld [vmem:[#allocation2 + $0x80] sm:$0xff]
    %v52 = vld [vmem:[#allocation2 + $0x88] sm:$0xff]
    %v53 = vld [vmem:[#allocation2 + $0x90] sm:$0xff]
    %v54 = vld [vmem:[#allocation2 + $0x98] sm:$0xff]
    %v55 = vld [vmem:[#allocation2 + $0xa0] sm:$0xff]
    %v56 = vld [vmem:[#allocation2 + $0xa8] sm:$0xff]
    %v57 = vld [vmem:[#allocation2 + $0xb0] sm:$0xff]
    %v58 = vld [vmem:[#allocation2 + $0xb8] sm:$0xff]
    %v59 = vld [vmem:[#allocation2 + $0xc0] sm:$0xff]
    %v60 = vld [vmem:[#allocation2 + $0xc8] sm:$0xff]
    %v61 = vld [vmem:[#allocation2 + $0xd0] sm:$0xff]
    %v62 = vld [vmem:[#allocation2 + $0xd8] sm:$0xff]
    %v63 = vld [vmem:[#allocation2 + $0xe0] sm:$0xff]
    %v64 = vld [vmem:[#allocation2 + $0xe8] sm:$0xff]
    %v65 = vld [vmem:[#allocation2 + $0xf0] sm:$0xff]
    %v66 = vld [vmem:[#allocation2 + $0xf8] sm:$0xff]
    %v67 = vadd.f32 %v35, %v36
    %68 = vadd.xlane.f32.xlu0 %v67
    %v69 = vpop.xlane.xlu0 %68
    %v70 = vadd.f32 %v37, %v38
    %71 = vadd.xlane.f32.xlu0 %v70
    %v72 = vpop.xlane.xlu0 %71
    %v73 = vadd.f32 %v39, %v40
    %74 = vadd.xlane.f32.xlu0 %v73
    %v75 = vpop.xlane.xlu0 %74
    %v76 = vadd.f32 %v41, %v42
    %77 = vadd.xlane.f32.xlu0 %v76
    %v78 = vpop.xlane.xlu0 %77
    %v79 = vadd.f32 %v43, %v44
    %80 = vadd.xlane.f32.xlu0 %v79
    %v81 = vpop.xlane.xlu0 %80
    %v82 = vadd.f32 %v45, %v46
    %83 = vadd.xlane.f32.xlu0 %v82
    %v84 = vpop.xlane.xlu0 %83
    %v85 = vadd.f32 %v47, %v48
    %86 = vadd.xlane.f32.xlu0 %v85
    %v87 = vpop.xlane.xlu0 %86
    %v88 = vadd.f32 %v49, %v50
    %89 = vadd.xlane.f32.xlu0 %v88
    %v90 = vpop.xlane.xlu0 %89
    %v91 = vadd.f32 %v51, %v52
    %92 = vadd.xlane.f32.xlu0 %v91
    %v93 = vpop.xlane.xlu0 %92
    %v94 = vadd.f32 %v53, %v54
    %95 = vadd.xlane.f32.xlu0 %v94
    %v96 = vpop.xlane.xlu0 %95
    %v97 = vadd.f32 %v55, %v56
    %98 = vadd.xlane.f32.xlu0 %v97
    %v99 = vpop.xlane.xlu0 %98
    %v100 = vadd.f32 %v57, %v58
    %101 = vadd.xlane.f32.xlu0 %v100
    %v102 = vpop.xlane.xlu0 %101
    %v103 = vadd.f32 %v59, %v60
    %104 = vadd.xlane.f32.xlu0 %v103
    %v105 = vpop.xlane.xlu0 %104
    %v106 = vadd.f32 %v61, %v62
    %107 = vadd.xlane.f32.xlu0 %v106
    %v108 = vpop.xlane.xlu0 %107
    %v109 = vadd.f32 %v63, %v64
    %110 = vadd.xlane.f32.xlu0 %v109
    %v111 = vpop.xlane.xlu0 %110
    %v112 = vadd.f32 %v65, %v66
    %113 = vadd.xlane.f32.xlu0 %v112
    %v114 = vpop.xlane.xlu0 %113
    %v115 = vmul.f32 %v69, 0.00390625
    %v116 = vmul.f32 %v72, 0.00390625
    %v117 = vmul.f32 %v75, 0.00390625
    %v118 = vmul.f32 %v78, 0.00390625
    %v119 = vmul.f32 %v81, 0.00390625
    %v120 = vmul.f32 %v84, 0.00390625
    %v121 = vmul.f32 %v87, 0.00390625
    %v122 = vmul.f32 %v90, 0.00390625
    %v123 = vmul.f32 %v93, 0.00390625
    %v124 = vmul.f32 %v96, 0.00390625
    %v125 = vmul.f32 %v99, 0.00390625
    %v126 = vmul.f32 %v102, 0.00390625
    %v127 = vmul.f32 %v105, 0.00390625
    %v128 = vmul.f32 %v108, 0.00390625
    %v129 = vmul.f32 %v111, 0.00390625
    %v130 = vmul.f32 %v114, 0.00390625
    %v131 = vld [vmem:[%s1] sm:$0xff]
    %v132 = vld [vmem:[%s1 + $0x8] sm:$0xff]
    %v133 = vld [vmem:[%s1 + $0x10] sm:$0xff]
    %v134 = vld [vmem:[%s1 + $0x18] sm:$0xff]
    %v135 = vld [vmem:[%s1 + $0x20] sm:$0xff]
    %v136 = vld [vmem:[%s1 + $0x28] sm:$0xff]
    %v137 = vld [vmem:[%s1 + $0x30] sm:$0xff]
    %v138 = vld [vmem:[%s1 + $0x38] sm:$0xff]
    %v139 = vmul.f32 %v131, %v115
    %v140 = vmul.f32 %v132, %v116
    %v141 = vmul.f32 %v133, %v117
    %v142 = vmul.f32 %v134, %v118
    %v143 = vmul.f32 %v135, %v119
    %v144 = vmul.f32 %v136, %v120
    %v145 = vmul.f32 %v137, %v121
    %v146 = vmul.f32 %v138, %v122
    %v147 = vmul.f32 %v131, %v123
    %v148 = vmul.f32 %v132, %v124
    %v149 = vmul.f32 %v133, %v125
    %v150 = vmul.f32 %v134, %v126
    %v151 = vmul.f32 %v135, %v127
    %v152 = vmul.f32 %v136, %v128
    %v153 = vmul.f32 %v137, %v129
    %v154 = vmul.f32 %v138, %v130
    %vm155 = vcmask 31744
    %v156 = vsel %vm155, %v139, 0.0
    %v157 = vsel %vm155, %v140, 0.0
    %v158 = vadd.f32 %v156, %v157
    %v159 = vsel %vm155, %v141, 0.0
    %v160 = vadd.f32 %v158, %v159
    %v161 = vsel %vm155, %v142, 0.0
    %v162 = vadd.f32 %v160, %v161
    %v163 = vsel %vm155, %v143, 0.0
    %v164 = vadd.f32 %v162, %v163
    %v165 = vsel %vm155, %v144, 0.0
    %v166 = vadd.f32 %v164, %v165
    %v167 = vsel %vm155, %v145, 0.0
    %v168 = vadd.f32 %v166, %v167
    %v169 = vsel %vm155, %v146, 0.0
    %v170 = vadd.f32 %v168, %v169
    %v171 = vrot.slane %v170, 4
    %v172 = vadd.f32 %v170, %v171
    %v173 = vrot.slane %v172, 2
    %v174 = vadd.f32 %v172, %v173
    %v175 = vrot.slane %v174, 1
    %v176 = vadd.f32 %v174, %v175
    %v177 = vsel %vm155, %v147, 0.0
    %v178 = vsel %vm155, %v148, 0.0
    %v179 = vadd.f32 %v177, %v178
    %v180 = vsel %vm155, %v149, 0.0
    %v181 = vadd.f32 %v179, %v180
    %v182 = vsel %vm155, %v150, 0.0
    %v183 = vadd.f32 %v181, %v182
    %v184 = vsel %vm155, %v151, 0.0
    %v185 = vadd.f32 %v183, %v184
    %v186 = vsel %vm155, %v152, 0.0
    %v187 = vadd.f32 %v185, %v186
    %v188 = vsel %vm155, %v153, 0.0
    %v189 = vadd.f32 %v187, %v188
    %v190 = vsel %vm155, %v154, 0.0
    %v191 = vadd.f32 %v189, %v190
    %v192 = vrot.slane %v191, 4
    %v193 = vadd.f32 %v191, %v192
    %v194 = vrot.slane %v193, 2
    %v195 = vadd.f32 %v193, %v194
    %v196 = vrot.slane %v195, 1
    %v197 = vadd.f32 %v195, %v196
    %v198 = vld [vmem:[%s2] sm:$0x1]
    %v199 = vadd.f32 %v176, %v198
    %v200 = vadd.f32 %v197, %v198
    %v201 = vmax.f32 %v199, 0.0
    %v202 = vmax.f32 %v200, 0.0
    %v203 = vld [vmem:[%s3] sm:$0xff]
    %v204 = vld [vmem:[%s3 + $0x8] sm:$0xff]
    %v205 = vld [vmem:[%s3 + $0x10] sm:$0xff]
    %v206 = vld [vmem:[%s3 + $0x18] sm:$0xff]
    %v207 = vld [vmem:[%s3 + $0x20] sm:$0xff]
    %v208 = vld [vmem:[%s3 + $0x28] sm:$0xff]
    %v209 = vld [vmem:[%s3 + $0x30] sm:$0xff]
    %v210 = vld [vmem:[%s3 + $0x38] sm:$0xff]
    %v211 = vlaneseq
    %v212 = vshrl.u32 %v211, 7
    %v213 = vsub.s32 0, %v212
    %v214 = vrot.slane %v201, %v213
    %v215 = vlaneseq
    %v216 = vshrl.u32 %v215, 7
    %v217 = vsub.s32 0, %v216
    %v218 = vrot.slane %v202, %v217
    %v219 = vmul.f32 %v203, %v214
    %v220 = vmul.f32 %v204, %v214
    %v221 = vmul.f32 %v205, %v214
    %v222 = vmul.f32 %v206, %v214
    %v223 = vmul.f32 %v207, %v214
    %v224 = vmul.f32 %v208, %v214
    %v225 = vmul.f32 %v209, %v214
    %v226 = vmul.f32 %v210, %v214
    %v227 = vmul.f32 %v203, %v218
    %v228 = vmul.f32 %v204, %v218
    %v229 = vmul.f32 %v205, %v218
    %v230 = vmul.f32 %v206, %v218
    %v231 = vmul.f32 %v207, %v218
    %v232 = vmul.f32 %v208, %v218
    %v233 = vmul.f32 %v209, %v218
    %v234 = vmul.f32 %v210, %v218
    %v235 = vsel %vm155, %v219, 0.0
    %236 = vadd.xlane.f32.xlu0 %v235
    %v237 = vpop.xlane.xlu0 %236
    %v238 = vsel %vm155, %v220, 0.0
    %239 = vadd.xlane.f32.xlu0 %v238
    %v240 = vpop.xlane.xlu0 %239
    %v241 = vsel %vm155, %v221, 0.0
    %242 = vadd.xlane.f32.xlu0 %v241
    %v243 = vpop.xlane.xlu0 %242
    %v244 = vsel %vm155, %v222, 0.0
    %245 = vadd.xlane.f32.xlu0 %v244
    %v246 = vpop.xlane.xlu0 %245
    %v247 = vsel %vm155, %v223, 0.0
    %248 = vadd.xlane.f32.xlu0 %v247
    %v249 = vpop.xlane.xlu0 %248
    %v250 = vsel %vm155, %v224, 0.0
    %251 = vadd.xlane.f32.xlu0 %v250
    %v252 = vpop.xlane.xlu0 %251
    %v253 = vsel %vm155, %v225, 0.0
    %254 = vadd.xlane.f32.xlu0 %v253
    %v255 = vpop.xlane.xlu0 %254
    %v256 = vsel %vm155, %v226, 0.0
    %257 = vadd.xlane.f32.xlu0 %v256
    %v258 = vpop.xlane.xlu0 %257
    %v259 = vsel %vm155, %v227, 0.0
    %260 = vadd.xlane.f32.xlu0 %v259
    %v261 = vpop.xlane.xlu0 %260
    %v262 = vsel %vm155, %v228, 0.0
    %263 = vadd.xlane.f32.xlu0 %v262
    %v264 = vpop.xlane.xlu0 %263
    %v265 = vsel %vm155, %v229, 0.0
    %266 = vadd.xlane.f32.xlu0 %v265
    %v267 = vpop.xlane.xlu0 %266
    %v268 = vsel %vm155, %v230, 0.0
    %269 = vadd.xlane.f32.xlu0 %v268
    %v270 = vpop.xlane.xlu0 %269
    %v271 = vsel %vm155, %v231, 0.0
    %272 = vadd.xlane.f32.xlu0 %v271
    %v273 = vpop.xlane.xlu0 %272
    %v274 = vsel %vm155, %v232, 0.0
    %275 = vadd.xlane.f32.xlu0 %v274
    %v276 = vpop.xlane.xlu0 %275
    %v277 = vsel %vm155, %v233, 0.0
    %278 = vadd.xlane.f32.xlu0 %v277
    %v279 = vpop.xlane.xlu0 %278
    %v280 = vsel %vm155, %v234, 0.0
    %281 = vadd.xlane.f32.xlu0 %v280
    %v282 = vpop.xlane.xlu0 %281
    %v283 = vld [vmem:[%s4] sm:$0xff]
    %v284 = vld [vmem:[%s4 + $0x8] sm:$0xff]
    %v285 = vld [vmem:[%s4 + $0x10] sm:$0xff]
    %v286 = vld [vmem:[%s4 + $0x18] sm:$0xff]
    %v287 = vld [vmem:[%s4 + $0x20] sm:$0xff]
    %v288 = vld [vmem:[%s4 + $0x28] sm:$0xff]
    %v289 = vld [vmem:[%s4 + $0x30] sm:$0xff]
    %v290 = vld [vmem:[%s4 + $0x38] sm:$0xff]
    %v291 = vadd.f32 %v237, %v283
    %v292 = vadd.f32 %v240, %v284
    %v293 = vadd.f32 %v243, %v285
    %v294 = vadd.f32 %v246, %v286
    %v295 = vadd.f32 %v249, %v287
    %v296 = vadd.f32 %v252, %v288
    %v297 = vadd.f32 %v255, %v289
    %v298 = vadd.f32 %v258, %v290
    %v299 = vadd.f32 %v261, %v283
    %v300 = vadd.f32 %v264, %v284
    %v301 = vadd.f32 %v267, %v285
    %v302 = vadd.f32 %v270, %v286
    %v303 = vadd.f32 %v273, %v287
    %v304 = vadd.f32 %v276, %v288
    %v305 = vadd.f32 %v279, %v289
    %v306 = vadd.f32 %v282, %v290
    %v307 = vxor.u32 %v291, 2147483648
    %v308 = vxor.u32 %v292, 2147483648
    %v309 = vxor.u32 %v293, 2147483648
    %v310 = vxor.u32 %v294, 2147483648
    %v311 = vxor.u32 %v295, 2147483648
    %v312 = vxor.u32 %v296, 2147483648
    %v313 = vxor.u32 %v297, 2147483648
    %v314 = vxor.u32 %v298, 2147483648
    %v315 = vxor.u32 %v299, 2147483648
    %v316 = vxor.u32 %v300, 2147483648
    %v317 = vxor.u32 %v301, 2147483648
    %v318 = vxor.u32 %v302, 2147483648
    %v319 = vxor.u32 %v303, 2147483648
    %v320 = vxor.u32 %v304, 2147483648
    %v321 = vxor.u32 %v305, 2147483648
    %v322 = vxor.u32 %v306, 2147483648
    %v323 = vmul.f32 %v307, 1.442695
    %v324 = vpow.pop %v323
    %v325 = vmul.f32 %v308, 1.442695
    %v326 = vpow.pop %v325
    %v327 = vmul.f32 %v309, 1.442695
    %v328 = vpow.pop %v327
    %v329 = vmul.f32 %v310, 1.442695
    %v330 = vpow.pop %v329
    %v331 = vmul.f32 %v311, 1.442695
    %v332 = vpow.pop %v331
    %v333 = vmul.f32 %v312, 1.442695
    %v334 = vpow.pop %v333
    %v335 = vmul.f32 %v313, 1.442695
    %v336 = vpow.pop %v335
    %v337 = vmul.f32 %v314, 1.442695
    %v338 = vpow.pop %v337
    %v339 = vmul.f32 %v315, 1.442695
    %v340 = vpow.pop %v339
    %v341 = vmul.f32 %v316, 1.442695
    %v342 = vpow.pop %v341
    %v343 = vmul.f32 %v317, 1.442695
    %v344 = vpow.pop %v343
    %v345 = vmul.f32 %v318, 1.442695
    %v346 = vpow.pop %v345
    %v347 = vmul.f32 %v319, 1.442695
    %v348 = vpow.pop %v347
    %v349 = vmul.f32 %v320, 1.442695
    %v350 = vpow.pop %v349
    %v351 = vmul.f32 %v321, 1.442695
    %v352 = vpow.pop %v351
    %v353 = vmul.f32 %v322, 1.442695
    %v354 = vpow.pop %v353
    %v355 = vadd.f32 %v324, 1.0
    %v356 = vadd.f32 %v326, 1.0
    %v357 = vadd.f32 %v328, 1.0
    %v358 = vadd.f32 %v330, 1.0
    %v359 = vadd.f32 %v332, 1.0
    %v360 = vadd.f32 %v334, 1.0
    %v361 = vadd.f32 %v336, 1.0
    %v362 = vadd.f32 %v338, 1.0
    %v363 = vadd.f32 %v340, 1.0
    %v364 = vadd.f32 %v342, 1.0
    %v365 = vadd.f32 %v344, 1.0
    %v366 = vadd.f32 %v346, 1.0
    %v367 = vadd.f32 %v348, 1.0
    %v368 = vadd.f32 %v350, 1.0
    %v369 = vadd.f32 %v352, 1.0
    %v370 = vadd.f32 %v354, 1.0
    %v371 = vrcp.pop %v355
    %v372 = vmul.f32 1.0, %v371
    %v373 = vrcp.pop %v356
    %v374 = vmul.f32 1.0, %v373
    %v375 = vrcp.pop %v357
    %v376 = vmul.f32 1.0, %v375
    %v377 = vrcp.pop %v358
    %v378 = vmul.f32 1.0, %v377
    %v379 = vrcp.pop %v359
    %v380 = vmul.f32 1.0, %v379
    %v381 = vrcp.pop %v360
    %v382 = vmul.f32 1.0, %v381
    %v383 = vrcp.pop %v361
    %v384 = vmul.f32 1.0, %v383
    %v385 = vrcp.pop %v362
    %v386 = vmul.f32 1.0, %v385
    %v387 = vrcp.pop %v363
    %v388 = vmul.f32 1.0, %v387
    %v389 = vrcp.pop %v364
    %v390 = vmul.f32 1.0, %v389
    %v391 = vrcp.pop %v365
    %v392 = vmul.f32 1.0, %v391
    %v393 = vrcp.pop %v366
    %v394 = vmul.f32 1.0, %v393
    %v395 = vrcp.pop %v367
    %v396 = vmul.f32 1.0, %v395
    %v397 = vrcp.pop %v368
    %v398 = vmul.f32 1.0, %v397
    %v399 = vrcp.pop %v369
    %v400 = vmul.f32 1.0, %v399
    %v401 = vrcp.pop %v370
    %v402 = vmul.f32 1.0, %v401
    %404 = vset.pattern.permute.xlu0 0
    %405 = vperm.xlu0 %404, %v372
    %v406 = vpop.permute.xlu0 %405
    %409 = vset.pattern.permute.xlu0 0
    %410 = vperm.xlu0 %409, %v374
    %v411 = vpop.permute.xlu0 %410
    %414 = vset.pattern.permute.xlu0 0
    %415 = vperm.xlu0 %414, %v376
    %v416 = vpop.permute.xlu0 %415
    %419 = vset.pattern.permute.xlu0 0
    %420 = vperm.xlu0 %419, %v378
    %v421 = vpop.permute.xlu0 %420
    %424 = vset.pattern.permute.xlu0 0
    %425 = vperm.xlu0 %424, %v380
    %v426 = vpop.permute.xlu0 %425
    %429 = vset.pattern.permute.xlu0 0
    %430 = vperm.xlu0 %429, %v382
    %v431 = vpop.permute.xlu0 %430
    %434 = vset.pattern.permute.xlu0 0
    %435 = vperm.xlu0 %434, %v384
    %v436 = vpop.permute.xlu0 %435
    %439 = vset.pattern.permute.xlu0 0
    %440 = vperm.xlu0 %439, %v386
    %v441 = vpop.permute.xlu0 %440
    %444 = vset.pattern.permute.xlu0 0
    %445 = vperm.xlu0 %444, %v388
    %v446 = vpop.permute.xlu0 %445
    %449 = vset.pattern.permute.xlu0 0
    %450 = vperm.xlu0 %449, %v390
    %v451 = vpop.permute.xlu0 %450
    %454 = vset.pattern.permute.xlu0 0
    %455 = vperm.xlu0 %454, %v392
    %v456 = vpop.permute.xlu0 %455
    %459 = vset.pattern.permute.xlu0 0
    %460 = vperm.xlu0 %459, %v394
    %v461 = vpop.permute.xlu0 %460
    %464 = vset.pattern.permute.xlu0 0
    %465 = vperm.xlu0 %464, %v396
    %v466 = vpop.permute.xlu0 %465
    %469 = vset.pattern.permute.xlu0 0
    %470 = vperm.xlu0 %469, %v398
    %v471 = vpop.permute.xlu0 %470
    %474 = vset.pattern.permute.xlu0 0
    %475 = vperm.xlu0 %474, %v400
    %v476 = vpop.permute.xlu0 %475
    %479 = vset.pattern.permute.xlu0 0
    %480 = vperm.xlu0 %479, %v402
    %v481 = vpop.permute.xlu0 %480
    %v483 = vmul.f32 %v35, %v406
    %v484 = vmul.f32 %v36, %v406
    %v485 = vmul.f32 %v37, %v411
    %v486 = vmul.f32 %v38, %v411
    %v487 = vmul.f32 %v39, %v416
    %v488 = vmul.f32 %v40, %v416
    %v489 = vmul.f32 %v41, %v421
    %v490 = vmul.f32 %v42, %v421
    %v491 = vmul.f32 %v43, %v426
    %v492 = vmul.f32 %v44, %v426
    %v493 = vmul.f32 %v45, %v431
    %v494 = vmul.f32 %v46, %v431
    %v495 = vmul.f32 %v47, %v436
    %v496 = vmul.f32 %v48, %v436
    %v497 = vmul.f32 %v49, %v441
    %v498 = vmul.f32 %v50, %v441
    %v499 = vmul.f32 %v51, %v446
    %v500 = vmul.f32 %v52, %v446
    %v501 = vmul.f32 %v53, %v451
    %v502 = vmul.f32 %v54, %v451
    %v503 = vmul.f32 %v55, %v456
    %v504 = vmul.f32 %v56, %v456
    %v505 = vmul.f32 %v57, %v461
    %v506 = vmul.f32 %v58, %v461
    %v507 = vmul.f32 %v59, %v466
    %v508 = vmul.f32 %v60, %v466
    %v509 = vmul.f32 %v61, %v471
    %v510 = vmul.f32 %v62, %v471
    %v511 = vmul.f32 %v63, %v476
    %v512 = vmul.f32 %v64, %v476
    %v513 = vmul.f32 %v65, %v481
    %v514 = vmul.f32 %v66, %v481
    %515 = vst [vmem:[#allocation5] sm:$0xff] %v483
    %516 = vst [vmem:[#allocation5 + $0x8] sm:$0xff] %v484
    %517 = vst [vmem:[#allocation5 + $0x10] sm:$0xff] %v485
    %518 = vst [vmem:[#allocation5 + $0x18] sm:$0xff] %v486
    %519 = vst [vmem:[#allocation5 + $0x20] sm:$0xff] %v487
    %520 = vst [vmem:[#allocation5 + $0x28] sm:$0xff] %v488
    %521 = vst [vmem:[#allocation5 + $0x30] sm:$0xff] %v489
    %522 = vst [vmem:[#allocation5 + $0x38] sm:$0xff] %v490
    %523 = vst [vmem:[#allocation5 + $0x40] sm:$0xff] %v491
    %524 = vst [vmem:[#allocation5 + $0x48] sm:$0xff] %v492
    %525 = vst [vmem:[#allocation5 + $0x50] sm:$0xff] %v493
    %526 = vst [vmem:[#allocation5 + $0x58] sm:$0xff] %v494
    %527 = vst [vmem:[#allocation5 + $0x60] sm:$0xff] %v495
    %528 = vst [vmem:[#allocation5 + $0x68] sm:$0xff] %v496
    %529 = vst [vmem:[#allocation5 + $0x70] sm:$0xff] %v497
    %530 = vst [vmem:[#allocation5 + $0x78] sm:$0xff] %v498
    %531 = vst [vmem:[#allocation5 + $0x80] sm:$0xff] %v499
    %532 = vst [vmem:[#allocation5 + $0x88] sm:$0xff] %v500
    %533 = vst [vmem:[#allocation5 + $0x90] sm:$0xff] %v501
    %534 = vst [vmem:[#allocation5 + $0x98] sm:$0xff] %v502
    %535 = vst [vmem:[#allocation5 + $0xa0] sm:$0xff] %v503
    %536 = vst [vmem:[#allocation5 + $0xa8] sm:$0xff] %v504
    %537 = vst [vmem:[#allocation5 + $0xb0] sm:$0xff] %v505
    %538 = vst [vmem:[#allocation5 + $0xb8] sm:$0xff] %v506
    %539 = vst [vmem:[#allocation5 + $0xc0] sm:$0xff] %v507
    %540 = vst [vmem:[#allocation5 + $0xc8] sm:$0xff] %v508
    %541 = vst [vmem:[#allocation5 + $0xd0] sm:$0xff] %v509
    %542 = vst [vmem:[#allocation5 + $0xd8] sm:$0xff] %v510
    %543 = vst [vmem:[#allocation5 + $0xe0] sm:$0xff] %v511
    %544 = vst [vmem:[#allocation5 + $0xe8] sm:$0xff] %v512
    %545 = vst [vmem:[#allocation5 + $0xf0] sm:$0xff] %v513
    %546 = vst [vmem:[#allocation5 + $0xf8] sm:$0xff] %v514
    // Predicated region
    $region26: #{tpu_custom_call.1} parent=1 // pred_check
      _
    $region27: #{tpu_custom_call.1} parent=1 // pred_check_branch
      %548 = sbr.rel (0) target = $region29
    $region28: #{tpu_custom_call.1} parent=1 // pred_region
      %s550 = ssub.s32 4096, 4096
      %551 = vsyncadd [#allocation4], %s550
      %s552 = sshll.u32 [#allocation5], 4
      %s553 = int_to_ptr.vmem [resolvable:$true] %s552
      %558 = dma.vmem_to_hbm [thread:$0]  %s553, 4096, %s5, [#allocation4], 256, 256, 16
    $region29: #{tpu_custom_call.1} parent=1 // pred_fallthru
      _
    // Predicated region
    $region30: #{tpu_custom_call.1} parent=1 // pred_check
      _
    $region31: #{tpu_custom_call.1} parent=1 // pred_check_branch
      %560 = sbr.rel (0) target = $region33
    $region32: #{tpu_custom_call.1} parent=1 // pred_region
      %561 = dma.done [#allocation4], 4096
    $region33: #{tpu_custom_call.1} parent=1 // pred_fallthru
      _
    %562 = vsyncpa [#allocation3], 1
    %563 = vsyncpa [#allocation4], 1

</llo_original>
